<compile_context>
chip_gen: v6e
topology: v6e:2x2x1
jax: 0.10.0
libtpu: 0.0.40
codegen_flags: <defaults>
</compile_context>

<pallas_src>
import jax
import jax.numpy as jnp
from jax import lax
from jax.experimental import pallas as pl
from jax.experimental.pallas import tpu as pltpu

_EPS = 1e-5


def bn_relu_kernel(x_ref, gamma_ref, beta_ref, o_ref):
    # x_ref:  (N, Cb, HW) f32 tile in VMEM (one channel tile, full batch/spatial)
    # gamma_ref / beta_ref: (C, 1) f32, full extent, resident across all steps
    n, cb, hw = x_ref.shape
    inv_n = jnp.float32(1.0 / (n * hw))

    x = x_ref[...]

    # Single-pass per-channel sums: lane-axis (HW) reduce first; skip the
    # redundant batch-axis reduce when N == 1 (static Python branch).
    s1 = jnp.sum(x, axis=2, keepdims=True)        # (N, Cb, 1)
    s2 = jnp.sum(x * x, axis=2, keepdims=True)    # (N, Cb, 1)
    if n > 1:
        s1 = jnp.sum(s1, axis=0, keepdims=True)   # (1, Cb, 1)
        s2 = jnp.sum(s2, axis=0, keepdims=True)

    mean = s1 * inv_n
    # Guard E[x^2] - mean^2 against negative cancellation before rsqrt.
    var = jnp.maximum(s2 * inv_n - mean * mean, 0.0)

    # Slice this grid step's channel range out of the resident (C, 1) params.
    c0 = pl.multiple_of(pl.program_id(0) * cb, cb)
    g = gamma_ref[pl.ds(c0, cb), :].reshape(1, cb, 1)
    b = beta_ref[pl.ds(c0, cb), :].reshape(1, cb, 1)

    # Fold normalization + affine into one per-channel scale/shift.
    scale = g * lax.rsqrt(var + _EPS)    # O(Cb) rsqrt on the EUP, once per channel
    shift = b - mean * scale

    # Re-read x from VMEM (3 vld/cycle) instead of keeping the whole tile live
    # across phases -> lower vreg pressure, no spill traffic.
    o_ref[...] = jnp.maximum(x_ref[...] * scale + shift, 0.0)


def _choose_channel_tile(C, N, HW, itemsize=4,
                         vmem_budget=24 * 1024 * 1024, cb_cap=128):
    """Largest channel tile (multiple of 8, divides C, <= cb_cap) whose
    double-buffered in+out tiles fit the VMEM budget.

    No minimum-grid-step preference: on single-TensorCore chips (v5e/v6e) extra
    grid steps are pure ~0.35us/step overhead, so fewer steps is better; the
    128-channel cap keeps vreg pressure bounded and yields exactly 2 steps at
    C=256 so the 2 TensorCores of v7x each take one.
    """
    if C % 8 != 0:
        return C   # odd C: single full-extent block satisfies the (8,128) rule
    best = None
    cb = 8
    while cb <= min(C, cb_cap) and C % cb == 0:
        if 4 * N * cb * HW * itemsize <= vmem_budget:   # 2 bufs x (in + out)
            best = cb
        cb *= 2
    if best is None:
        # TODO(synk): fall back to a two-phase (stats pass + normalize pass)
        # kernel when even an 8-channel tile with the full batch overflows VMEM.
        best = 8
    return best


def batchnorm_relu(x_nchw, gamma, beta):
    """x_nchw: (N, C, H, W) f32; gamma, beta: (C,) f32.

    Training-mode BatchNorm2d (biased batch stats, eps=1e-5, affine) fused with
    ReLU, exactly 1 HBM read + 1 HBM write of x.
    # TODO(synk): PyTorch's running_mean/running_var (momentum=0.1) buffer
    # update is not reproduced; only the normalized forward output is returned.
    """
    N, C, H, W = x_nchw.shape
    HW = H * W

    x = x_nchw.reshape(N, C, HW)            # free reshape, no transpose
    gamma_c1 = gamma.reshape(C, 1).astype(jnp.float32)
    beta_c1 = beta.reshape(C, 1).astype(jnp.float32)

    cb = _choose_channel_tile(C, N, HW)
    grid = (C // cb,)

    out = pl.pallas_call(
        bn_relu_kernel,
        out_shape=jax.ShapeDtypeStruct((N, C, HW), jnp.float32),
        grid_spec=pltpu.PrefetchScalarGridSpec(
            num_scalar_prefetch=0,
            grid=grid,
            in_specs=[
                pl.BlockSpec((N, cb, HW), lambda i: (0, i, 0)),
                # gamma/beta: one full-extent resident block, no per-step DMA.
                pl.BlockSpec((C, 1), lambda i: (0, 0)),
                pl.BlockSpec((C, 1), lambda i: (0, 0)),
            ],
            out_specs=pl.BlockSpec((N, cb, HW), lambda i: (0, i, 0)),
        ),
        compiler_params=pltpu.CompilerParams(
            dimension_semantics=("parallel",),
            vmem_limit_bytes=32 * 1024 * 1024,
        ),
    )(x, gamma_c1, beta_c1)

    return out.reshape(N, C, H, W)


if __name__ == "__main__":
    key = jax.random.PRNGKey(0)
    kx, kg, kb = jax.random.split(key, 3)

    N, C, H, W = 1, 256, 14, 14   # matches BatchNorm2d(256) and x454's shape
    x = jax.random.normal(kx, (N, C, H, W), dtype=jnp.float32)
    # Deterministic non-trivial affine params to exercise the scale/shift path.
    gamma = 1.0 + 0.1 * jax.random.normal(kg, (C,), dtype=jnp.float32)
    beta = 0.1 * jax.random.normal(kb, (C,), dtype=jnp.float32)

    out = batchnorm_relu(x, gamma, beta)
    jax.block_until_ready(out)

    # Pure-JAX reference: training-mode BN (biased batch variance) + ReLU.
    mean = jnp.mean(x, axis=(0, 2, 3), keepdims=True)
    var = jnp.mean((x - mean) ** 2, axis=(0, 2, 3), keepdims=True)
    ref = jnp.maximum(
        (x - mean) * lax.rsqrt(var + _EPS) * gamma.reshape(1, C, 1, 1)
        + beta.reshape(1, C, 1, 1),
        0.0,
    )
    assert out.shape == (N, C, H, W)
    assert jnp.max(jnp.abs(out - ref)) < 1e-4

    print("KERNEL_OK")
</pallas_src>

<mosaic_0001>
module attributes {stable_mosaic.version = 11 : i64} {
  func.func @bn_relu_kernel(%arg0: i32, %arg1: memref<1x128x196xf32, #tpu.memory_space<vmem>>, %arg2: memref<256x1xf32, #tpu.memory_space<vmem>>, %arg3: memref<256x1xf32, #tpu.memory_space<vmem>>, %arg4: memref<1x128x196xf32, #tpu.memory_space<vmem>>) attributes {dimension_semantics = [#tpu.dimension_semantics<parallel>], iteration_bounds = array<i64: 2>, scalar_prefetch = 0 : i64, scratch_operands = 0 : i64, tpu.core_type = #tpu.core_type<tc>, window_params = [{transform_indices = @transform_0, window_bounds = array<i64: 1, 128, 196>}, {pipeline_mode = #tpu.pipeline_mode<synchronous>, transform_indices = @transform_1, window_bounds = array<i64: 256, 1>}, {pipeline_mode = #tpu.pipeline_mode<synchronous>, transform_indices = @transform_2, window_bounds = array<i64: 256, 1>}, {transform_indices = @transform_3, window_bounds = array<i64: 1, 128, 196>}]} {
    %c0 = arith.constant 0 : index
    %c0_0 = arith.constant 0 : index
    %c0_1 = arith.constant 0 : index
    %0 = vector.load %arg1[%c0, %c0_0, %c0_1] : memref<1x128x196xf32, #tpu.memory_space<vmem>>, vector<1x128x196xf32>
    %cst = arith.constant dense<0.000000e+00> : vector<1x128xf32>
    %1 = vector.multi_reduction <add>, %0, %cst [2] : vector<1x128x196xf32> to vector<1x128xf32>
    %2 = vector.shape_cast %1 : vector<1x128xf32> to vector<1x128x1xf32>
    %3 = arith.mulf %0, %0 : vector<1x128x196xf32>
    %cst_2 = arith.constant dense<0.000000e+00> : vector<1x128xf32>
    %4 = vector.multi_reduction <add>, %3, %cst_2 [2] : vector<1x128x196xf32> to vector<1x128xf32>
    %5 = vector.shape_cast %4 : vector<1x128xf32> to vector<1x128x1xf32>
    %cst_3 = arith.constant 0.00510204071 : f32
    %6 = vector.broadcast %cst_3 : f32 to vector<1x128x1xf32>
    %7 = arith.mulf %2, %6 : vector<1x128x1xf32>
    %cst_4 = arith.constant 0.00510204071 : f32
    %8 = vector.broadcast %cst_4 : f32 to vector<1x128x1xf32>
    %9 = arith.mulf %5, %8 : vector<1x128x1xf32>
    %10 = arith.mulf %7, %7 : vector<1x128x1xf32>
    %11 = arith.subf %9, %10 : vector<1x128x1xf32>
    %cst_5 = arith.constant 0.000000e+00 : f32
    %12 = vector.broadcast %cst_5 : f32 to vector<1x128x1xf32>
    %13 = arith.maximumf %11, %12 : vector<1x128x1xf32>
    %c128_i32 = arith.constant 128 : i32
    %14 = arith.muli %arg0, %c128_i32 : i32
    %15 = tpu.assume_multiple %14, 128 : i32
    %16 = arith.index_cast %15 : i32 to index
    %c0_6 = arith.constant 0 : index
    %17 = vector.load %arg2[%16, %c0_6] : memref<256x1xf32, #tpu.memory_space<vmem>>, vector<128x1xf32>
    %18 = vector.shape_cast %17 : vector<128x1xf32> to vector<1x128x1xf32>
    %19 = arith.index_cast %15 : i32 to index
    %c0_7 = arith.constant 0 : index
    %20 = vector.load %arg3[%19, %c0_7] : memref<256x1xf32, #tpu.memory_space<vmem>>, vector<128x1xf32>
    %21 = vector.shape_cast %20 : vector<128x1xf32> to vector<1x128x1xf32>
    %cst_8 = arith.constant 9.99999974E-6 : f32
    %22 = vector.broadcast %cst_8 : f32 to vector<1x128x1xf32>
    %23 = arith.addf %13, %22 : vector<1x128x1xf32>
    %24 = math.rsqrt %23 : vector<1x128x1xf32>
    %25 = arith.mulf %18, %24 : vector<1x128x1xf32>
    %26 = arith.mulf %7, %25 : vector<1x128x1xf32>
    %27 = arith.subf %21, %26 : vector<1x128x1xf32>
    %c0_9 = arith.constant 0 : index
    %c0_10 = arith.constant 0 : index
    %c0_11 = arith.constant 0 : index
    %28 = vector.load %arg1[%c0_9, %c0_10, %c0_11] : memref<1x128x196xf32, #tpu.memory_space<vmem>>, vector<1x128x196xf32>
    %29 = vector.broadcast %25 : vector<1x128x1xf32> to vector<1x128x196xf32>
    %30 = arith.mulf %28, %29 : vector<1x128x196xf32>
    %31 = vector.broadcast %27 : vector<1x128x1xf32> to vector<1x128x196xf32>
    %32 = arith.addf %30, %31 : vector<1x128x196xf32>
    %cst_12 = arith.constant 0.000000e+00 : f32
    %33 = vector.broadcast %cst_12 : f32 to vector<1x128x196xf32>
    %34 = arith.maximumf %32, %33 : vector<1x128x196xf32>
    %c0_13 = arith.constant 0 : index
    %c0_14 = arith.constant 0 : index
    %c0_15 = arith.constant 0 : index
    %35 = vector.load %arg4[%c0_13, %c0_14, %c0_15] : memref<1x128x196xf32, #tpu.memory_space<vmem>>, vector<1x128x196xf32>
    tpu.vector_store %arg4[%c0_13, %c0_14, %c0_15], %34 {strides = array<i32>} : memref<1x128x196xf32, #tpu.memory_space<vmem>>, vector<1x128x196xf32>,
    return
  }
  func.func @transform_0(%arg0: i32) -> (i32, i32, i32) {
    %c0_i32 = arith.constant 0 : i32
    %c0_i32_0 = arith.constant 0 : i32
    %c0_i32_1 = arith.constant 0 : i32
    return %c0_i32, %arg0, %c0_i32_0 : i32, i32, i32
  }
  func.func @transform_1(%arg0: i32) -> (i32, i32) {
    %c0_i32 = arith.constant 0 : i32
    %c0_i32_0 = arith.constant 0 : i32
    %c0_i32_1 = arith.constant 0 : i32
    return %c0_i32, %c0_i32_0 : i32, i32
  }
  func.func @transform_2(%arg0: i32) -> (i32, i32) {
    %c0_i32 = arith.constant 0 : i32
    %c0_i32_0 = arith.constant 0 : i32
    %c0_i32_1 = arith.constant 0 : i32
    return %c0_i32, %c0_i32_0 : i32, i32
  }
  func.func @transform_3(%arg0: i32) -> (i32, i32, i32) {
    %c0_i32 = arith.constant 0 : i32
    %c0_i32_0 = arith.constant 0 : i32
    %c0_i32_1 = arith.constant 0 : i32
    return %c0_i32, %arg0, %c0_i32_0 : i32, i32, i32
  }
}

</mosaic_0001>

<llo_original>
// kernel: tpu_custom_call.1
$region0: #{tpu_custom_call.1}
  #allocation0 [shape = 'u32[]', space=smem, size = 0x4, offset = 0x4, fixed_abs, tag = 'smem constant byte address 0x4 - core index']
  #allocation1 [shape = 'u32[144,128]{1,0:T(1,128)}', space=vmem, size = 0x12000, scoped, tag = 'internal scratch']
  %s0 = inlined_call_operand.vmem [shape: f32[1,256,196], index: 0, kind: input, shape index: {}]
  %s1 = inlined_call_operand.vmem [shape: f32[256,1], index: 1, kind: input, shape index: {}]
  %s2 = inlined_call_operand.vmem [shape: f32[256,1], index: 2, kind: input, shape index: {}]
  %s3 = inlined_call_operand.vmem [shape: f32[1,256,196], index: 3, kind: output, shape index: {}]
  %s4 = sld [smem:[#allocation0]]
  $region45: #{tpu_custom_call.1} parent=0
    _
  %s6 = ssub.s32 1, %s4
  %s7 = scalar_select 0, %s6, %s4
  loop: start=0, step=1, limit=4
  $region2: #{tpu_custom_call.1} parent=0 // loop_pre_header
    _
  $region3: #{tpu_custom_call.1} parent=0 // loop_header
    %s9 = sphi 0, %s13
    %p10 = scmp.ge.s32.totalorder %s9, 4
    %s19 = sphi 0, %s21
    %s22 = sphi 0, %s19
    %s23 = sphi 0, %s22
    %s39 = sphi 0, %s23
    %s43 = sphi 0, %s43
    %s45 = sphi 0, %s43
    %s46 = sphi 0, %s45
    %s60 = sphi 0, %s46
    %s64 = sphi 0, %s64
    %s66 = sphi 0, %s64
    %s67 = sphi 0, %s66
    %s81 = sphi 0, %s67
    %s87 = sphi 0, %s89
    %s90 = sphi 0, %s87
    %s91 = sphi 0, %s90
    %s107 = sphi 0, %s91
  $region4: #{tpu_custom_call.1} parent=0 // loop_header_branch
    %12 = sbr.rel (%p10) target = $region8
  $region5: #{tpu_custom_call.1} parent=0 // loop_body
    %s14 = ssub.s32 %s9, 1
    %s15 = ssub.s32 %s9, 2
    %s16 = sadd.s32 %s9, 1
    %s17 = ssub.s32 %s9, %s16
    %p18 = scmp.eq.s32.totalorder %s17, 0
    %s20 = sadd.s32 %s19, 1
    %s21 = scalar_select %p18, %s19, %s20
    %p24 = pneg %p18
    %p25 = scmp.eq.s32.totalorder %s9, 1
    %p26 = por %p24, %p25
    %p27 = scmp.ne.s32.totalorder %s19, %s22
    %p28 = scmp.eq.s32.totalorder %s9, 0
    %p29 = por %p27, %p28
    %p30 = scmp.ne.s32.totalorder %s19, %s22
    %p31 = scmp.eq.s32.totalorder %s14, 1
    %p32 = por %p30, %p31
    %p33 = scmp.ne.s32.totalorder %s22, %s23
    %p34 = scmp.eq.s32.totalorder %s14, 0
    %p35 = por %p33, %p34
    %p36 = scmp.ne.s32.totalorder %s22, %s23
    %p37 = scmp.eq.s32.totalorder %s15, 1
    %p38 = por %p36, %p37
    %p40 = scmp.ne.s32.totalorder %s23, %s39
    %p41 = scmp.eq.s32.totalorder %s15, 0
    %p42 = por %p40, %p41
    %s44 = sadd.s32 %s43, 1
    %p47 = scmp.eq.s32.totalorder %s9, 1
    %p48 = scmp.ne.s32.totalorder %s43, %s45
    %p49 = scmp.eq.s32.totalorder %s9, 0
    %p50 = por %p48, %p49
    %p51 = scmp.ne.s32.totalorder %s43, %s45
    %p52 = scmp.eq.s32.totalorder %s14, 1
    %p53 = por %p51, %p52
    %p54 = scmp.ne.s32.totalorder %s45, %s46
    %p55 = scmp.eq.s32.totalorder %s14, 0
    %p56 = por %p54, %p55
    %p57 = scmp.ne.s32.totalorder %s45, %s46
    %p58 = scmp.eq.s32.totalorder %s15, 1
    %p59 = por %p57, %p58
    %p61 = scmp.ne.s32.totalorder %s46, %s60
    %p62 = scmp.eq.s32.totalorder %s15, 0
    %p63 = por %p61, %p62
    %s65 = sadd.s32 %s64, 1
    %p68 = scmp.eq.s32.totalorder %s9, 1
    %p69 = scmp.ne.s32.totalorder %s64, %s66
    %p70 = scmp.eq.s32.totalorder %s9, 0
    %p71 = por %p69, %p70
    %p72 = scmp.ne.s32.totalorder %s64, %s66
    %p73 = scmp.eq.s32.totalorder %s14, 1
    %p74 = por %p72, %p73
    %p75 = scmp.ne.s32.totalorder %s66, %s67
    %p76 = scmp.eq.s32.totalorder %s14, 0
    %p77 = por %p75, %p76
    %p78 = scmp.ne.s32.totalorder %s66, %s67
    %p79 = scmp.eq.s32.totalorder %s15, 1
    %p80 = por %p78, %p79
    %p82 = scmp.ne.s32.totalorder %s67, %s81
    %p83 = scmp.eq.s32.totalorder %s15, 0
    %p84 = por %p82, %p83
    %s85 = ssub.s32 %s9, %s16
    %p86 = scmp.eq.s32.totalorder %s85, 0
    %s88 = sadd.s32 %s87, 1
    %s89 = scalar_select %p86, %s87, %s88
    %p92 = pneg %p86
    %p93 = scmp.eq.s32.totalorder %s9, 1
    %p94 = por %p92, %p93
    %p95 = scmp.ne.s32.totalorder %s87, %s90
    %p96 = scmp.eq.s32.totalorder %s9, 0
    %p97 = por %p95, %p96
    %p98 = scmp.ne.s32.totalorder %s87, %s90
    %p99 = scmp.eq.s32.totalorder %s14, 1
    %p100 = por %p98, %p99
    %p101 = scmp.ne.s32.totalorder %s90, %s91
    %p102 = scmp.eq.s32.totalorder %s14, 0
    %p103 = por %p101, %p102
    %p104 = scmp.ne.s32.totalorder %s90, %s91
    %p105 = scmp.eq.s32.totalorder %s15, 1
    %p106 = por %p104, %p105
    %p108 = scmp.ne.s32.totalorder %s91, %s107
    %p109 = scmp.eq.s32.totalorder %s15, 0
    %p110 = por %p108, %p109
    %p111 = scmp.le.s32.totalorder 1, %s9
    %p112 = scmp.lt.s32.totalorder %s9, 3
    %p113 = pnand %p111, %p112
    %p114 = pneg %p113
    // Predicated region
    $region9: #{tpu_custom_call.1} parent=5 // pred_check
      _
    $region10: #{tpu_custom_call.1} parent=5 // pred_check_branch
      %116 = sbr.rel (%p113) target = $region12
    $region11: #{tpu_custom_call.1} parent=5 // pred_region
      %s117 = ssub.s32 %s9, 1
      // Predicated region
      $region13: #{tpu_custom_call.1} parent=11 // pred_check
        %p118 = pneg %p56
      $region14: #{tpu_custom_call.1} parent=11 // pred_check_branch
        %120 = sbr.rel (%p118) target = $region16
      $region15: #{tpu_custom_call.1} parent=11 // pred_region
        _
      $region16: #{tpu_custom_call.1} parent=11 // pred_fallthru
        _
      // Predicated region
      $region17: #{tpu_custom_call.1} parent=11 // pred_check
        %p121 = pneg %p77
      $region18: #{tpu_custom_call.1} parent=11 // pred_check_branch
        %123 = sbr.rel (%p121) target = $region20
      $region19: #{tpu_custom_call.1} parent=11 // pred_region
        _
      $region20: #{tpu_custom_call.1} parent=11 // pred_fallthru
        _
    $region12: #{tpu_custom_call.1} parent=5 // pred_fallthru
      _
    %p124 = scmp.lt.s32.totalorder %s9, 2
    // Predicated region
    $region21: #{tpu_custom_call.1} parent=5 // pred_check
      %p125 = pneg %p124
    $region22: #{tpu_custom_call.1} parent=5 // pred_check_branch
      %127 = sbr.rel (%p125) target = $region24
    $region23: #{tpu_custom_call.1} parent=5 // pred_region
      // Predicated region
      $region25: #{tpu_custom_call.1} parent=23 // pred_check
        %p128 = pneg %p29
      $region26: #{tpu_custom_call.1} parent=23 // pred_check_branch
        %130 = sbr.rel (%p128) target = $region28
      $region27: #{tpu_custom_call.1} parent=23 // pred_region
        %s131 = smul.u32 16, %s9
        %p132 = scmp.lt.s32.totalorder %s131, 31
        %s133 = scalar_select %p132, %s131, 31
        %s134 = smul.addr %s133, 2
        %s135 = smul.addr %s134, 8
        %s136 = scalar_lea.vmem %s0, %s135
        %s137 = smul.u32 16, %s9
      $region28: #{tpu_custom_call.1} parent=23 // pred_fallthru
        _
    $region24: #{tpu_custom_call.1} parent=5 // pred_fallthru
      _
    %p138 = scmp.le.s32.totalorder 1, %s9
    %p139 = scmp.lt.s32.totalorder %s9, 3
    %p140 = pnand %p138, %p139
    %p141 = pneg %p140
    // Predicated region
    $region29: #{tpu_custom_call.1} parent=5 // pred_check
      _
    $region30: #{tpu_custom_call.1} parent=5 // pred_check_branch
      %143 = sbr.rel (%p140) target = $region32
    $region31: #{tpu_custom_call.1} parent=5 // pred_region
      %s144 = ssub.s32 %s9, 1
      %s145 = smul.u32 16, %s14
      %p146 = scmp.lt.s32.totalorder %s145, 31
      %s147 = scalar_select %p146, %s145, 31
      %s148 = smul.addr %s147, 2
      %s149 = smul.addr %s148, 8
      %s150 = scalar_lea.vmem %s0, %s149
      %p151 = pneg %p35
      %p152 = pneg %p32
      %p153 = pneg %p56
      %p154 = pneg %p53
      %p155 = pneg %p77
      %p156 = pneg %p74
      %p157 = pneg %p103
      %p158 = pneg %p100
      %s159 = smul.u32 16, %s14
      %p160 = scmp.lt.s32.totalorder %s159, 31
      %s161 = scalar_select %p160, %s159, 31
      %s162 = smul.addr %s161, 2
      %s163 = smul.addr %s162, 8
      %s164 = scalar_lea.vmem %s3, %s163
      %s165 = smul.u32 16, %s14
      %p166 = scmp.lt.s32.totalorder %s165, 31
      %s167 = scalar_select %p166, %s165, 31
      %s168 = smul.addr %s167, 2
      %s169 = smul.addr %s168, 8
      %s170 = scalar_lea.vmem %s0, %s169
      %s171 = smul.u32 16, %s14
      %s172 = smul.u32 16, %s14
      %p173 = scmp.lt.s32.totalorder %s172, 31
      %s174 = scalar_select %p173, %s172, 31
      %s175 = smul.addr %s174, 2
      %s176 = smul.addr %s175, 8
      %s177 = scalar_lea.vmem %s3, %s176
      %s178 = smul.u32 16, %s14
      %v179 = vld [vmem:[%s170] sm:$0xff]
      %v180 = vld [vmem:[%s170 + $0x8] sm:$0xff]
      %v181 = vld [vmem:[%s170 + $0x10] sm:$0xff]
      %v182 = vld [vmem:[%s170 + $0x18] sm:$0xff]
      %v183 = vld [vmem:[%s170 + $0x20] sm:$0xff]
      %v184 = vld [vmem:[%s170 + $0x28] sm:$0xff]
      %v185 = vld [vmem:[%s170 + $0x30] sm:$0xff]
      %v186 = vld [vmem:[%s170 + $0x38] sm:$0xff]
      %v187 = vld [vmem:[%s170 + $0x40] sm:$0xff]
      %v188 = vld [vmem:[%s170 + $0x48] sm:$0xff]
      %v189 = vld [vmem:[%s170 + $0x50] sm:$0xff]
      %v190 = vld [vmem:[%s170 + $0x58] sm:$0xff]
      %v191 = vld [vmem:[%s170 + $0x60] sm:$0xff]
      %v192 = vld [vmem:[%s170 + $0x68] sm:$0xff]
      %v193 = vld [vmem:[%s170 + $0x70] sm:$0xff]
      %v194 = vld [vmem:[%s170 + $0x78] sm:$0xff]
      %v195 = vld [vmem:[%s170 + $0x80] sm:$0xff]
      %v196 = vld [vmem:[%s170 + $0x88] sm:$0xff]
      %v197 = vld [vmem:[%s170 + $0x90] sm:$0xff]
      %v198 = vld [vmem:[%s170 + $0x98] sm:$0xff]
      %v199 = vld [vmem:[%s170 + $0xa0] sm:$0xff]
      %v200 = vld [vmem:[%s170 + $0xa8] sm:$0xff]
      %v201 = vld [vmem:[%s170 + $0xb0] sm:$0xff]
      %v202 = vld [vmem:[%s170 + $0xb8] sm:$0xff]
      %v203 = vld [vmem:[%s170 + $0xc0] sm:$0xff]
      %v204 = vld [vmem:[%s170 + $0xc8] sm:$0xff]
      %v205 = vld [vmem:[%s170 + $0xd0] sm:$0xff]
      %v206 = vld [vmem:[%s170 + $0xd8] sm:$0xff]
      %v207 = vld [vmem:[%s170 + $0xe0] sm:$0xff]
      %v208 = vld [vmem:[%s170 + $0xe8] sm:$0xff]
      %v209 = vld [vmem:[%s170 + $0xf0] sm:$0xff]
      %v210 = vld [vmem:[%s170 + $0xf8] sm:$0xff]
      %vm211 = vcmask 556032
      %v212 = vsel %vm211, %v180, 0.0
      %v213 = vadd.f32 %v179, %v212
      %214 = vadd.xlane.f32.xlu0 %v213
      %v215 = vpop.xlane.xlu0 %214
      %v216 = vsel %vm211, %v182, 0.0
      %v217 = vadd.f32 %v181, %v216
      %218 = vadd.xlane.f32.xlu0 %v217
      %v219 = vpop.xlane.xlu0 %218
      %v220 = vsel %vm211, %v184, 0.0
      %v221 = vadd.f32 %v183, %v220
      %222 = vadd.xlane.f32.xlu0 %v221
      %v223 = vpop.xlane.xlu0 %222
      %v224 = vsel %vm211, %v186, 0.0
      %v225 = vadd.f32 %v185, %v224
      %226 = vadd.xlane.f32.xlu0 %v225
      %v227 = vpop.xlane.xlu0 %226
      %v228 = vsel %vm211, %v188, 0.0
      %v229 = vadd.f32 %v187, %v228
      %230 = vadd.xlane.f32.xlu0 %v229
      %v231 = vpop.xlane.xlu0 %230
      %v232 = vsel %vm211, %v190, 0.0
      %v233 = vadd.f32 %v189, %v232
      %234 = vadd.xlane.f32.xlu0 %v233
      %v235 = vpop.xlane.xlu0 %234
      %v236 = vsel %vm211, %v192, 0.0
      %v237 = vadd.f32 %v191, %v236
      %238 = vadd.xlane.f32.xlu0 %v237
      %v239 = vpop.xlane.xlu0 %238
      %v240 = vsel %vm211, %v194, 0.0
      %v241 = vadd.f32 %v193, %v240
      %242 = vadd.xlane.f32.xlu0 %v241
      %v243 = vpop.xlane.xlu0 %242
      %v244 = vsel %vm211, %v196, 0.0
      %v245 = vadd.f32 %v195, %v244
      %246 = vadd.xlane.f32.xlu0 %v245
      %v247 = vpop.xlane.xlu0 %246
      %v248 = vsel %vm211, %v198, 0.0
      %v249 = vadd.f32 %v197, %v248
      %250 = vadd.xlane.f32.xlu0 %v249
      %v251 = vpop.xlane.xlu0 %250
      %v252 = vsel %vm211, %v200, 0.0
      %v253 = vadd.f32 %v199, %v252
      %254 = vadd.xlane.f32.xlu0 %v253
      %v255 = vpop.xlane.xlu0 %254
      %v256 = vsel %vm211, %v202, 0.0
      %v257 = vadd.f32 %v201, %v256
      %258 = vadd.xlane.f32.xlu0 %v257
      %v259 = vpop.xlane.xlu0 %258
      %v260 = vsel %vm211, %v204, 0.0
      %v261 = vadd.f32 %v203, %v260
      %262 = vadd.xlane.f32.xlu0 %v261
      %v263 = vpop.xlane.xlu0 %262
      %v264 = vsel %vm211, %v206, 0.0
      %v265 = vadd.f32 %v205, %v264
      %266 = vadd.xlane.f32.xlu0 %v265
      %v267 = vpop.xlane.xlu0 %266
      %v268 = vsel %vm211, %v208, 0.0
      %v269 = vadd.f32 %v207, %v268
      %270 = vadd.xlane.f32.xlu0 %v269
      %v271 = vpop.xlane.xlu0 %270
      %v272 = vsel %vm211, %v210, 0.0
      %v273 = vadd.f32 %v209, %v272
      %274 = vadd.xlane.f32.xlu0 %v273
      %v275 = vpop.xlane.xlu0 %274
      %v276 = vmul.f32 %v179, %v179
      %v277 = vmul.f32 %v180, %v180
      %v278 = vmul.f32 %v181, %v181
      %v279 = vmul.f32 %v182, %v182
      %v280 = vmul.f32 %v183, %v183
      %v281 = vmul.f32 %v184, %v184
      %v282 = vmul.f32 %v185, %v185
      %v283 = vmul.f32 %v186, %v186
      %v284 = vmul.f32 %v187, %v187
      %v285 = vmul.f32 %v188, %v188
      %v286 = vmul.f32 %v189, %v189
      %v287 = vmul.f32 %v190, %v190
      %v288 = vmul.f32 %v191, %v191
      %v289 = vmul.f32 %v192, %v192
      %v290 = vmul.f32 %v193, %v193
      %v291 = vmul.f32 %v194, %v194
      %v292 = vmul.f32 %v195, %v195
      %v293 = vmul.f32 %v196, %v196
      %v294 = vmul.f32 %v197, %v197
      %v295 = vmul.f32 %v198, %v198
      %v296 = vmul.f32 %v199, %v199
      %v297 = vmul.f32 %v200, %v200
      %v298 = vmul.f32 %v201, %v201
      %v299 = vmul.f32 %v202, %v202
      %v300 = vmul.f32 %v203, %v203
      %v301 = vmul.f32 %v204, %v204
      %v302 = vmul.f32 %v205, %v205
      %v303 = vmul.f32 %v206, %v206
      %v304 = vmul.f32 %v207, %v207
      %v305 = vmul.f32 %v208, %v208
      %v306 = vmul.f32 %v209, %v209
      %v307 = vmul.f32 %v210, %v210
      %v308 = vsel %vm211, %v277, 0.0
      %v309 = vadd.f32 %v276, %v308
      %310 = vadd.xlane.f32.xlu0 %v309
      %v311 = vpop.xlane.xlu0 %310
      %v312 = vsel %vm211, %v279, 0.0
      %v313 = vadd.f32 %v278, %v312
      %314 = vadd.xlane.f32.xlu0 %v313
      %v315 = vpop.xlane.xlu0 %314
      %v316 = vsel %vm211, %v281, 0.0
      %v317 = vadd.f32 %v280, %v316
      %318 = vadd.xlane.f32.xlu0 %v317
      %v319 = vpop.xlane.xlu0 %318
      %v320 = vsel %vm211, %v283, 0.0
      %v321 = vadd.f32 %v282, %v320
      %322 = vadd.xlane.f32.xlu0 %v321
      %v323 = vpop.xlane.xlu0 %322
      %v324 = vsel %vm211, %v285, 0.0
      %v325 = vadd.f32 %v284, %v324
      %326 = vadd.xlane.f32.xlu0 %v325
      %v327 = vpop.xlane.xlu0 %326
      %v328 = vsel %vm211, %v287, 0.0
      %v329 = vadd.f32 %v286, %v328
      %330 = vadd.xlane.f32.xlu0 %v329
      %v331 = vpop.xlane.xlu0 %330
      %v332 = vsel %vm211, %v289, 0.0
      %v333 = vadd.f32 %v288, %v332
      %334 = vadd.xlane.f32.xlu0 %v333
      %v335 = vpop.xlane.xlu0 %334
      %v336 = vsel %vm211, %v291, 0.0
      %v337 = vadd.f32 %v290, %v336
      %338 = vadd.xlane.f32.xlu0 %v337
      %v339 = vpop.xlane.xlu0 %338
      %v340 = vsel %vm211, %v293, 0.0
      %v341 = vadd.f32 %v292, %v340
      %342 = vadd.xlane.f32.xlu0 %v341
      %v343 = vpop.xlane.xlu0 %342
      %v344 = vsel %vm211, %v295, 0.0
      %v345 = vadd.f32 %v294, %v344
      %346 = vadd.xlane.f32.xlu0 %v345
      %v347 = vpop.xlane.xlu0 %346
      %v348 = vsel %vm211, %v297, 0.0
      %v349 = vadd.f32 %v296, %v348
      %350 = vadd.xlane.f32.xlu0 %v349
      %v351 = vpop.xlane.xlu0 %350
      %v352 = vsel %vm211, %v299, 0.0
      %v353 = vadd.f32 %v298, %v352
      %354 = vadd.xlane.f32.xlu0 %v353
      %v355 = vpop.xlane.xlu0 %354
      %v356 = vsel %vm211, %v301, 0.0
      %v357 = vadd.f32 %v300, %v356
      %358 = vadd.xlane.f32.xlu0 %v357
      %v359 = vpop.xlane.xlu0 %358
      %v360 = vsel %vm211, %v303, 0.0
      %v361 = vadd.f32 %v302, %v360
      %362 = vadd.xlane.f32.xlu0 %v361
      %v363 = vpop.xlane.xlu0 %362
      %v364 = vsel %vm211, %v305, 0.0
      %v365 = vadd.f32 %v304, %v364
      %366 = vadd.xlane.f32.xlu0 %v365
      %v367 = vpop.xlane.xlu0 %366
      %v368 = vsel %vm211, %v307, 0.0
      %v369 = vadd.f32 %v306, %v368
      %370 = vadd.xlane.f32.xlu0 %v369
      %v371 = vpop.xlane.xlu0 %370
      %v372 = vmul.f32 %v215, 0.0051020407
      %v373 = vmul.f32 %v219, 0.0051020407
      %v374 = vmul.f32 %v223, 0.0051020407
      %v375 = vmul.f32 %v227, 0.0051020407
      %v376 = vmul.f32 %v231, 0.0051020407
      %v377 = vmul.f32 %v235, 0.0051020407
      %v378 = vmul.f32 %v239, 0.0051020407
      %v379 = vmul.f32 %v243, 0.0051020407
      %v380 = vmul.f32 %v247, 0.0051020407
      %v381 = vmul.f32 %v251, 0.0051020407
      %v382 = vmul.f32 %v255, 0.0051020407
      %v383 = vmul.f32 %v259, 0.0051020407
      %v384 = vmul.f32 %v263, 0.0051020407
      %v385 = vmul.f32 %v267, 0.0051020407
      %v386 = vmul.f32 %v271, 0.0051020407
      %v387 = vmul.f32 %v275, 0.0051020407
      %v388 = vmul.f32 %v311, 0.0051020407
      %v389 = vmul.f32 %v315, 0.0051020407
      %v390 = vmul.f32 %v319, 0.0051020407
      %v391 = vmul.f32 %v323, 0.0051020407
      %v392 = vmul.f32 %v327, 0.0051020407
      %v393 = vmul.f32 %v331, 0.0051020407
      %v394 = vmul.f32 %v335, 0.0051020407
      %v395 = vmul.f32 %v339, 0.0051020407
      %v396 = vmul.f32 %v343, 0.0051020407
      %v397 = vmul.f32 %v347, 0.0051020407
      %v398 = vmul.f32 %v351, 0.0051020407
      %v399 = vmul.f32 %v355, 0.0051020407
      %v400 = vmul.f32 %v359, 0.0051020407
      %v401 = vmul.f32 %v363, 0.0051020407
      %v402 = vmul.f32 %v367, 0.0051020407
      %v403 = vmul.f32 %v371, 0.0051020407
      %v404 = vmul.f32 %v372, %v372
      %v405 = vmul.f32 %v373, %v373
      %v406 = vmul.f32 %v374, %v374
      %v407 = vmul.f32 %v375, %v375
      %v408 = vmul.f32 %v376, %v376
      %v409 = vmul.f32 %v377, %v377
      %v410 = vmul.f32 %v378, %v378
      %v411 = vmul.f32 %v379, %v379
      %v412 = vmul.f32 %v380, %v380
      %v413 = vmul.f32 %v381, %v381
      %v414 = vmul.f32 %v382, %v382
      %v415 = vmul.f32 %v383, %v383
      %v416 = vmul.f32 %v384, %v384
      %v417 = vmul.f32 %v385, %v385
      %v418 = vmul.f32 %v386, %v386
      %v419 = vmul.f32 %v387, %v387
      %v420 = vsub.f32 %v388, %v404
      %v421 = vsub.f32 %v389, %v405
      %v422 = vsub.f32 %v390, %v406
      %v423 = vsub.f32 %v391, %v407
      %v424 = vsub.f32 %v392, %v408
      %v425 = vsub.f32 %v393, %v409
      %v426 = vsub.f32 %v394, %v410
      %v427 = vsub.f32 %v395, %v411
      %v428 = vsub.f32 %v396, %v412
      %v429 = vsub.f32 %v397, %v413
      %v430 = vsub.f32 %v398, %v414
      %v431 = vsub.f32 %v399, %v415
      %v432 = vsub.f32 %v400, %v416
      %v433 = vsub.f32 %v401, %v417
      %v434 = vsub.f32 %v402, %v418
      %v435 = vsub.f32 %v403, %v419
      %v436 = vmax.f32 %v420, 0.0
      %v437 = vmax.f32 %v421, 0.0
      %v438 = vmax.f32 %v422, 0.0
      %v439 = vmax.f32 %v423, 0.0
      %v440 = vmax.f32 %v424, 0.0
      %v441 = vmax.f32 %v425, 0.0
      %v442 = vmax.f32 %v426, 0.0
      %v443 = vmax.f32 %v427, 0.0
      %v444 = vmax.f32 %v428, 0.0
      %v445 = vmax.f32 %v429, 0.0
      %v446 = vmax.f32 %v430, 0.0
      %v447 = vmax.f32 %v431, 0.0
      %v448 = vmax.f32 %v432, 0.0
      %v449 = vmax.f32 %v433, 0.0
      %v450 = vmax.f32 %v434, 0.0
      %v451 = vmax.f32 %v435, 0.0
      %s452 = smul.u32 %s14, 128
      %s453 = scalar_lea.vmem %s1, %s452
      %v454 = vld [vmem:[%s453] sm:$0xff]
      %v455 = vld [vmem:[%s453 + $0x8] sm:$0xff]
      %v456 = vld [vmem:[%s453 + $0x10] sm:$0xff]
      %v457 = vld [vmem:[%s453 + $0x18] sm:$0xff]
      %v458 = vld [vmem:[%s453 + $0x20] sm:$0xff]
      %v459 = vld [vmem:[%s453 + $0x28] sm:$0xff]
      %v460 = vld [vmem:[%s453 + $0x30] sm:$0xff]
      %v461 = vld [vmem:[%s453 + $0x38] sm:$0xff]
      %v462 = vld [vmem:[%s453 + $0x40] sm:$0xff]
      %v463 = vld [vmem:[%s453 + $0x48] sm:$0xff]
      %v464 = vld [vmem:[%s453 + $0x50] sm:$0xff]
      %v465 = vld [vmem:[%s453 + $0x58] sm:$0xff]
      %v466 = vld [vmem:[%s453 + $0x60] sm:$0xff]
      %v467 = vld [vmem:[%s453 + $0x68] sm:$0xff]
      %v468 = vld [vmem:[%s453 + $0x70] sm:$0xff]
      %v469 = vld [vmem:[%s453 + $0x78] sm:$0xff]
      %s470 = scalar_lea.vmem %s2, %s452
      %v471 = vld [vmem:[%s470] sm:$0xff]
      %v472 = vld [vmem:[%s470 + $0x8] sm:$0xff]
      %v473 = vld [vmem:[%s470 + $0x10] sm:$0xff]
      %v474 = vld [vmem:[%s470 + $0x18] sm:$0xff]
      %v475 = vld [vmem:[%s470 + $0x20] sm:$0xff]
      %v476 = vld [vmem:[%s470 + $0x28] sm:$0xff]
      %v477 = vld [vmem:[%s470 + $0x30] sm:$0xff]
      %v478 = vld [vmem:[%s470 + $0x38] sm:$0xff]
      %v479 = vld [vmem:[%s470 + $0x40] sm:$0xff]
      %v480 = vld [vmem:[%s470 + $0x48] sm:$0xff]
      %v481 = vld [vmem:[%s470 + $0x50] sm:$0xff]
      %v482 = vld [vmem:[%s470 + $0x58] sm:$0xff]
      %v483 = vld [vmem:[%s470 + $0x60] sm:$0xff]
      %v484 = vld [vmem:[%s470 + $0x68] sm:$0xff]
      %v485 = vld [vmem:[%s470 + $0x70] sm:$0xff]
      %v486 = vld [vmem:[%s470 + $0x78] sm:$0xff]
      %v487 = vadd.f32 %v436, 1e-05
      %v488 = vadd.f32 %v437, 1e-05
      %v489 = vadd.f32 %v438, 1e-05
      %v490 = vadd.f32 %v439, 1e-05
      %v491 = vadd.f32 %v440, 1e-05
      %v492 = vadd.f32 %v441, 1e-05
      %v493 = vadd.f32 %v442, 1e-05
      %v494 = vadd.f32 %v443, 1e-05
      %v495 = vadd.f32 %v444, 1e-05
      %v496 = vadd.f32 %v445, 1e-05
      %v497 = vadd.f32 %v446, 1e-05
      %v498 = vadd.f32 %v447, 1e-05
      %v499 = vadd.f32 %v448, 1e-05
      %v500 = vadd.f32 %v449, 1e-05
      %v501 = vadd.f32 %v450, 1e-05
      %v502 = vadd.f32 %v451, 1e-05
      %v503 = vrsqrt.pop %v487
      %v504 = vrsqrt.pop %v488
      %v505 = vrsqrt.pop %v489
      %v506 = vrsqrt.pop %v490
      %v507 = vrsqrt.pop %v491
      %v508 = vrsqrt.pop %v492
      %v509 = vrsqrt.pop %v493
      %v510 = vrsqrt.pop %v494
      %v511 = vrsqrt.pop %v495
      %v512 = vrsqrt.pop %v496
      %v513 = vrsqrt.pop %v497
      %v514 = vrsqrt.pop %v498
      %v515 = vrsqrt.pop %v499
      %v516 = vrsqrt.pop %v500
      %v517 = vrsqrt.pop %v501
      %v518 = vrsqrt.pop %v502
      %v519 = vmul.f32 %v454, %v503
      %v520 = vmul.f32 %v455, %v504
      %v521 = vmul.f32 %v456, %v505
      %v522 = vmul.f32 %v457, %v506
      %v523 = vmul.f32 %v458, %v507
      %v524 = vmul.f32 %v459, %v508
      %v525 = vmul.f32 %v460, %v509
      %v526 = vmul.f32 %v461, %v510
      %v527 = vmul.f32 %v462, %v511
      %v528 = vmul.f32 %v463, %v512
      %v529 = vmul.f32 %v464, %v513
      %v530 = vmul.f32 %v465, %v514
      %v531 = vmul.f32 %v466, %v515
      %v532 = vmul.f32 %v467, %v516
      %v533 = vmul.f32 %v468, %v517
      %v534 = vmul.f32 %v469, %v518
      %v535 = vmul.f32 %v372, %v519
      %v536 = vmul.f32 %v373, %v520
      %v537 = vmul.f32 %v374, %v521
      %v538 = vmul.f32 %v375, %v522
      %v539 = vmul.f32 %v376, %v523
      %v540 = vmul.f32 %v377, %v524
      %v541 = vmul.f32 %v378, %v525
      %v542 = vmul.f32 %v379, %v526
      %v543 = vmul.f32 %v380, %v527
      %v544 = vmul.f32 %v381, %v528
      %v545 = vmul.f32 %v382, %v529
      %v546 = vmul.f32 %v383, %v530
      %v547 = vmul.f32 %v384, %v531
      %v548 = vmul.f32 %v385, %v532
      %v549 = vmul.f32 %v386, %v533
      %v550 = vmul.f32 %v387, %v534
      %v551 = vsub.f32 %v471, %v535
      %v552 = vsub.f32 %v472, %v536
      %v553 = vsub.f32 %v473, %v537
      %v554 = vsub.f32 %v474, %v538
      %v555 = vsub.f32 %v475, %v539
      %v556 = vsub.f32 %v476, %v540
      %v557 = vsub.f32 %v477, %v541
      %v558 = vsub.f32 %v478, %v542
      %v559 = vsub.f32 %v479, %v543
      %v560 = vsub.f32 %v480, %v544
      %v561 = vsub.f32 %v481, %v545
      %v562 = vsub.f32 %v482, %v546
      %v563 = vsub.f32 %v483, %v547
      %v564 = vsub.f32 %v484, %v548
      %v565 = vsub.f32 %v485, %v549
      %v566 = vsub.f32 %v486, %v550
      %568 = vset.pattern.permute.xlu0 0
      %569 = vperm.xlu0 %568, %v519
      %v570 = vpop.permute.xlu0 %569
      %573 = vset.pattern.permute.xlu0 0
      %574 = vperm.xlu0 %573, %v520
      %v575 = vpop.permute.xlu0 %574
      %578 = vset.pattern.permute.xlu0 0
      %579 = vperm.xlu0 %578, %v521
      %v580 = vpop.permute.xlu0 %579
      %583 = vset.pattern.permute.xlu0 0
      %584 = vperm.xlu0 %583, %v522
      %v585 = vpop.permute.xlu0 %584
      %588 = vset.pattern.permute.xlu0 0
      %589 = vperm.xlu0 %588, %v523
      %v590 = vpop.permute.xlu0 %589
      %593 = vset.pattern.permute.xlu0 0
      %594 = vperm.xlu0 %593, %v524
      %v595 = vpop.permute.xlu0 %594
      %598 = vset.pattern.permute.xlu0 0
      %599 = vperm.xlu0 %598, %v525
      %v600 = vpop.permute.xlu0 %599
      %603 = vset.pattern.permute.xlu0 0
      %604 = vperm.xlu0 %603, %v526
      %v605 = vpop.permute.xlu0 %604
      %608 = vset.pattern.permute.xlu0 0
      %609 = vperm.xlu0 %608, %v527
      %v610 = vpop.permute.xlu0 %609
      %613 = vset.pattern.permute.xlu0 0
      %614 = vperm.xlu0 %613, %v528
      %v615 = vpop.permute.xlu0 %614
      %618 = vset.pattern.permute.xlu0 0
      %619 = vperm.xlu0 %618, %v529
      %v620 = vpop.permute.xlu0 %619
      %623 = vset.pattern.permute.xlu0 0
      %624 = vperm.xlu0 %623, %v530
      %v625 = vpop.permute.xlu0 %624
      %628 = vset.pattern.permute.xlu0 0
      %629 = vperm.xlu0 %628, %v531
      %v630 = vpop.permute.xlu0 %629
      %633 = vset.pattern.permute.xlu0 0
      %634 = vperm.xlu0 %633, %v532
      %v635 = vpop.permute.xlu0 %634
      %638 = vset.pattern.permute.xlu0 0
      %639 = vperm.xlu0 %638, %v533
      %v640 = vpop.permute.xlu0 %639
      %643 = vset.pattern.permute.xlu0 0
      %644 = vperm.xlu0 %643, %v534
      %v645 = vpop.permute.xlu0 %644
      %v647 = vmul.f32 %v179, %v570
      %v648 = vmul.f32 %v180, %v570
      %v649 = vmul.f32 %v181, %v575
      %v650 = vmul.f32 %v182, %v575
      %v651 = vmul.f32 %v183, %v580
      %v652 = vmul.f32 %v184, %v580
      %v653 = vmul.f32 %v185, %v585
      %v654 = vmul.f32 %v186, %v585
      %v655 = vmul.f32 %v187, %v590
      %v656 = vmul.f32 %v188, %v590
      %v657 = vmul.f32 %v189, %v595
      %v658 = vmul.f32 %v190, %v595
      %v659 = vmul.f32 %v191, %v600
      %v660 = vmul.f32 %v192, %v600
      %v661 = vmul.f32 %v193, %v605
      %v662 = vmul.f32 %v194, %v605
      %v663 = vmul.f32 %v195, %v610
      %v664 = vmul.f32 %v196, %v610
      %v665 = vmul.f32 %v197, %v615
      %v666 = vmul.f32 %v198, %v615
      %v667 = vmul.f32 %v199, %v620
      %v668 = vmul.f32 %v200, %v620
      %v669 = vmul.f32 %v201, %v625
      %v670 = vmul.f32 %v202, %v625
      %v671 = vmul.f32 %v203, %v630
      %v672 = vmul.f32 %v204, %v630
      %v673 = vmul.f32 %v205, %v635
      %v674 = vmul.f32 %v206, %v635
      %v675 = vmul.f32 %v207, %v640
      %v676 = vmul.f32 %v208, %v640
      %v677 = vmul.f32 %v209, %v645
      %v678 = vmul.f32 %v210, %v645
      %680 = vset.pattern.permute.xlu0 0
      %681 = vperm.xlu0 %680, %v551
      %v682 = vpop.permute.xlu0 %681
      %685 = vset.pattern.permute.xlu0 0
      %686 = vperm.xlu0 %685, %v552
      %v687 = vpop.permute.xlu0 %686
      %690 = vset.pattern.permute.xlu0 0
      %691 = vperm.xlu0 %690, %v553
      %v692 = vpop.permute.xlu0 %691
      %695 = vset.pattern.permute.xlu0 0
      %696 = vperm.xlu0 %695, %v554
      %v697 = vpop.permute.xlu0 %696
      %700 = vset.pattern.permute.xlu0 0
      %701 = vperm.xlu0 %700, %v555
      %v702 = vpop.permute.xlu0 %701
      %705 = vset.pattern.permute.xlu0 0
      %706 = vperm.xlu0 %705, %v556
      %v707 = vpop.permute.xlu0 %706
      %710 = vset.pattern.permute.xlu0 0
      %711 = vperm.xlu0 %710, %v557
      %v712 = vpop.permute.xlu0 %711
      %715 = vset.pattern.permute.xlu0 0
      %716 = vperm.xlu0 %715, %v558
      %v717 = vpop.permute.xlu0 %716
      %720 = vset.pattern.permute.xlu0 0
      %721 = vperm.xlu0 %720, %v559
      %v722 = vpop.permute.xlu0 %721
      %725 = vset.pattern.permute.xlu0 0
      %726 = vperm.xlu0 %725, %v560
      %v727 = vpop.permute.xlu0 %726
      %730 = vset.pattern.permute.xlu0 0
      %731 = vperm.xlu0 %730, %v561
      %v732 = vpop.permute.xlu0 %731
      %735 = vset.pattern.permute.xlu0 0
      %736 = vperm.xlu0 %735, %v562
      %v737 = vpop.permute.xlu0 %736
      %740 = vset.pattern.permute.xlu0 0
      %741 = vperm.xlu0 %740, %v563
      %v742 = vpop.permute.xlu0 %741
      %745 = vset.pattern.permute.xlu0 0
      %746 = vperm.xlu0 %745, %v564
      %v747 = vpop.permute.xlu0 %746
      %750 = vset.pattern.permute.xlu0 0
      %751 = vperm.xlu0 %750, %v565
      %v752 = vpop.permute.xlu0 %751
      %755 = vset.pattern.permute.xlu0 0
      %756 = vperm.xlu0 %755, %v566
      %v757 = vpop.permute.xlu0 %756
      %v759 = vadd.f32 %v647, %v682
      %v760 = vadd.f32 %v648, %v682
      %v761 = vadd.f32 %v649, %v687
      %v762 = vadd.f32 %v650, %v687
      %v763 = vadd.f32 %v651, %v692
      %v764 = vadd.f32 %v652, %v692
      %v765 = vadd.f32 %v653, %v697
      %v766 = vadd.f32 %v654, %v697
      %v767 = vadd.f32 %v655, %v702
      %v768 = vadd.f32 %v656, %v702
      %v769 = vadd.f32 %v657, %v707
      %v770 = vadd.f32 %v658, %v707
      %v771 = vadd.f32 %v659, %v712
      %v772 = vadd.f32 %v660, %v712
      %v773 = vadd.f32 %v661, %v717
      %v774 = vadd.f32 %v662, %v717
      %v775 = vadd.f32 %v663, %v722
      %v776 = vadd.f32 %v664, %v722
      %v777 = vadd.f32 %v665, %v727
      %v778 = vadd.f32 %v666, %v727
      %v779 = vadd.f32 %v667, %v732
      %v780 = vadd.f32 %v668, %v732
      %v781 = vadd.f32 %v669, %v737
      %v782 = vadd.f32 %v670, %v737
      %v783 = vadd.f32 %v671, %v742
      %v784 = vadd.f32 %v672, %v742
      %v785 = vadd.f32 %v673, %v747
      %v786 = vadd.f32 %v674, %v747
      %v787 = vadd.f32 %v675, %v752
      %v788 = vadd.f32 %v676, %v752
      %v789 = vadd.f32 %v677, %v757
      %v790 = vadd.f32 %v678, %v757
      %v791 = vmax.f32 %v759, 0.0
      %v792 = vmax.f32 %v760, 0.0
      %v793 = vmax.f32 %v761, 0.0
      %v794 = vmax.f32 %v762, 0.0
      %v795 = vmax.f32 %v763, 0.0
      %v796 = vmax.f32 %v764, 0.0
      %v797 = vmax.f32 %v765, 0.0
      %v798 = vmax.f32 %v766, 0.0
      %v799 = vmax.f32 %v767, 0.0
      %v800 = vmax.f32 %v768, 0.0
      %v801 = vmax.f32 %v769, 0.0
      %v802 = vmax.f32 %v770, 0.0
      %v803 = vmax.f32 %v771, 0.0
      %v804 = vmax.f32 %v772, 0.0
      %v805 = vmax.f32 %v773, 0.0
      %v806 = vmax.f32 %v774, 0.0
      %v807 = vmax.f32 %v775, 0.0
      %v808 = vmax.f32 %v776, 0.0
      %v809 = vmax.f32 %v777, 0.0
      %v810 = vmax.f32 %v778, 0.0
      %v811 = vmax.f32 %v779, 0.0
      %v812 = vmax.f32 %v780, 0.0
      %v813 = vmax.f32 %v781, 0.0
      %v814 = vmax.f32 %v782, 0.0
      %v815 = vmax.f32 %v783, 0.0
      %v816 = vmax.f32 %v784, 0.0
      %v817 = vmax.f32 %v785, 0.0
      %v818 = vmax.f32 %v786, 0.0
      %v819 = vmax.f32 %v787, 0.0
      %v820 = vmax.f32 %v788, 0.0
      %v821 = vmax.f32 %v789, 0.0
      %v822 = vmax.f32 %v790, 0.0
      %823 = vst [vmem:[%s177] sm:$0xff] %v791
      %824 = vst.msk [vmem:[%s177 + $0x8] sm:$0xff] %vm211, %v792
      %825 = vst [vmem:[%s177 + $0x10] sm:$0xff] %v793
      %826 = vst.msk [vmem:[%s177 + $0x18] sm:$0xff] %vm211, %v794
      %827 = vst [vmem:[%s177 + $0x20] sm:$0xff] %v795
      %828 = vst.msk [vmem:[%s177 + $0x28] sm:$0xff] %vm211, %v796
      %829 = vst [vmem:[%s177 + $0x30] sm:$0xff] %v797
      %830 = vst.msk [vmem:[%s177 + $0x38] sm:$0xff] %vm211, %v798
      %831 = vst [vmem:[%s177 + $0x40] sm:$0xff] %v799
      %832 = vst.msk [vmem:[%s177 + $0x48] sm:$0xff] %vm211, %v800
      %833 = vst [vmem:[%s177 + $0x50] sm:$0xff] %v801
      %834 = vst.msk [vmem:[%s177 + $0x58] sm:$0xff] %vm211, %v802
      %835 = vst [vmem:[%s177 + $0x60] sm:$0xff] %v803
      %836 = vst.msk [vmem:[%s177 + $0x68] sm:$0xff] %vm211, %v804
      %837 = vst [vmem:[%s177 + $0x70] sm:$0xff] %v805
      %838 = vst.msk [vmem:[%s177 + $0x78] sm:$0xff] %vm211, %v806
      %839 = vst [vmem:[%s177 + $0x80] sm:$0xff] %v807
      %840 = vst.msk [vmem:[%s177 + $0x88] sm:$0xff] %vm211, %v808
      %841 = vst [vmem:[%s177 + $0x90] sm:$0xff] %v809
      %842 = vst.msk [vmem:[%s177 + $0x98] sm:$0xff] %vm211, %v810
      %843 = vst [vmem:[%s177 + $0xa0] sm:$0xff] %v811
      %844 = vst.msk [vmem:[%s177 + $0xa8] sm:$0xff] %vm211, %v812
      %845 = vst [vmem:[%s177 + $0xb0] sm:$0xff] %v813
      %846 = vst.msk [vmem:[%s177 + $0xb8] sm:$0xff] %vm211, %v814
      %847 = vst [vmem:[%s177 + $0xc0] sm:$0xff] %v815
      %848 = vst.msk [vmem:[%s177 + $0xc8] sm:$0xff] %vm211, %v816
      %849 = vst [vmem:[%s177 + $0xd0] sm:$0xff] %v817
      %850 = vst.msk [vmem:[%s177 + $0xd8] sm:$0xff] %vm211, %v818
      %851 = vst [vmem:[%s177 + $0xe0] sm:$0xff] %v819
      %852 = vst.msk [vmem:[%s177 + $0xe8] sm:$0xff] %vm211, %v820
      %853 = vst [vmem:[%s177 + $0xf0] sm:$0xff] %v821
      %854 = vst.msk [vmem:[%s177 + $0xf8] sm:$0xff] %vm211, %v822
      %s855 = smul.u32 16, %s14
      %p856 = scmp.lt.s32.totalorder %s855, 31
      %s857 = scalar_select %p856, %s855, 31
      %s858 = smul.addr %s857, 2
      %s859 = smul.addr %s858, 8
      %s860 = scalar_lea.vmem %s3, %s859
      // Predicated region
      $region33: #{tpu_custom_call.1} parent=31 // pred_check
        %p861 = pneg %p100
      $region34: #{tpu_custom_call.1} parent=31 // pred_check_branch
        %863 = sbr.rel (%p861) target = $region36
      $region35: #{tpu_custom_call.1} parent=31 // pred_region
        %s864 = smul.u32 16, %s14
      $region36: #{tpu_custom_call.1} parent=31 // pred_fallthru
        _
    $region32: #{tpu_custom_call.1} parent=5 // pred_fallthru
      _
    %p865 = scmp.le.s32.totalorder 2, %s9
    // Predicated region
    $region37: #{tpu_custom_call.1} parent=5 // pred_check
      %p866 = pneg %p865
    $region38: #{tpu_custom_call.1} parent=5 // pred_check_branch
      %868 = sbr.rel (%p866) target = $region40
    $region39: #{tpu_custom_call.1} parent=5 // pred_region
      %s869 = ssub.s32 %s9, 2
      // Predicated region
      $region41: #{tpu_custom_call.1} parent=39 // pred_check
        %p870 = pneg %p106
      $region42: #{tpu_custom_call.1} parent=39 // pred_check_branch
        %872 = sbr.rel (%p870) target = $region44
      $region43: #{tpu_custom_call.1} parent=39 // pred_region
        %s873 = smul.u32 16, %s15
        %p874 = scmp.lt.s32.totalorder %s873, 31
        %s875 = scalar_select %p874, %s873, 31
        %s876 = smul.addr %s875, 2
        %s877 = smul.addr %s876, 8
        %s878 = scalar_lea.vmem %s3, %s877
      $region44: #{tpu_custom_call.1} parent=39 // pred_fallthru
        _
    $region40: #{tpu_custom_call.1} parent=5 // pred_fallthru
      _
  $region6: #{tpu_custom_call.1} parent=0 // loop_footer
    %s13 = sadd.s32 1, %s9
  $region7: #{tpu_custom_call.1} parent=0 // loop_footer_branch
    %8 = sbr.rel target = $region3
  $region8: #{tpu_custom_call.1} parent=0 // loop_exit
    _

</llo_original>
